<compile_context>
chip_gen: v7x
topology: tpu7x:2x2x1
jax: 0.10.0
libtpu: 0.0.40
codegen_flags: <defaults>
</compile_context>

<pallas_src>
import jax
import jax.numpy as jnp
from jax.experimental import pallas as pl
from jax.experimental.pallas import tpu as pltpu


_LANE = 128


def _round_up(x, m):
    return ((x + m - 1) // m) * m


def _policy_kernel(x_ref, w1_ref, b1_ref, w2_ref, b2_ref, w3_ref, b3_ref,
                   mean_ref):
    """One batch tile: mean = tanh(tanh(x@W1+b1)@W2+b2) @ W3 + b3."""
    cdt = w1_ref.dtype  # matmul operand dtype (f32 or bf16); accumulate f32

    x = x_ref[...].astype(cdt)
    h1 = jnp.tanh(
        jnp.dot(x, w1_ref[...], preferred_element_type=jnp.float32)
        + b1_ref[...]
    )
    h2 = jnp.tanh(
        jnp.dot(h1.astype(cdt), w2_ref[...], preferred_element_type=jnp.float32)
        + b2_ref[...]
    )
    mean = (
        jnp.dot(h2.astype(cdt), w3_ref[...], preferred_element_type=jnp.float32)
        + b3_ref[...]
    )
    mean_ref[...] = mean.astype(mean_ref.dtype)


def init_params(key, state_dim, action_dim, hidden_dim=128, log_std_init=0.0):
    """nn.Linear-style init + the Policy-specific rescaling
    (action_mean weight *0.1, bias *0.0)."""
    ks = jax.random.split(key, 6)

    def linear_init(kw, kb, fan_in, fan_out):
        bound = 1.0 / jnp.sqrt(fan_in)
        # stored as (in, out) so the kernel computes x @ W
        w = jax.random.uniform(kw, (fan_in, fan_out), jnp.float32, -bound, bound)
        b = jax.random.uniform(kb, (1, fan_out), jnp.float32, -bound, bound)
        return w, b

    w1, b1 = linear_init(ks[0], ks[1], state_dim, hidden_dim)
    w2, b2 = linear_init(ks[2], ks[3], hidden_dim, hidden_dim)
    w3, b3 = linear_init(ks[4], ks[5], hidden_dim, action_dim)
    w3 = w3 * 0.1
    b3 = b3 * 0.0
    log_std = jnp.ones((1, action_dim), jnp.float32) * log_std_init
    return {"w1": w1, "b1": b1, "w2": w2, "b2": b2, "w3": w3, "b3": b3,
            "log_std": log_std}


def prepare_params(params, compute_dtype=jnp.float32):
    """One-time lane-dense padding (every feature dim -> multiple of 128) and
    optional bf16 cast of matmul weights.  Biases stay f32."""
    w1, b1 = params["w1"], params["b1"]
    w2, b2 = params["w2"], params["b2"]
    w3, b3 = params["w3"], params["b3"]

    state_dim, hidden = w1.shape
    action_dim = w3.shape[1]
    s_pad = _round_up(state_dim, _LANE)
    h_pad = _round_up(hidden, _LANE)
    a_pad = _round_up(action_dim, _LANE)

    def pad2(a, rows, cols):
        return jnp.pad(a, ((0, rows - a.shape[0]), (0, cols - a.shape[1])))

    return {
        "w1": pad2(w1, s_pad, h_pad).astype(compute_dtype),
        "b1": pad2(b1, 1, h_pad).astype(jnp.float32),
        "w2": pad2(w2, h_pad, h_pad).astype(compute_dtype),
        "b2": pad2(b2, 1, h_pad).astype(jnp.float32),
        "w3": pad2(w3, h_pad, a_pad).astype(compute_dtype),
        "b3": pad2(b3, 1, a_pad).astype(jnp.float32),
        "log_std": params["log_std"].astype(jnp.float32),
        "state_dim": state_dim,
        "action_dim": action_dim,
    }


def policy_forward(state, prep, tile_b=256):
    """Fused Policy.forward. state: (B, state_dim) f32.
    Returns (mean, std), each (B, action_dim) f32."""
    B, state_dim = state.shape
    assert state_dim == prep["state_dim"]
    action_dim = prep["action_dim"]

    w1, b1 = prep["w1"], prep["b1"]
    w2, b2 = prep["w2"], prep["b2"]
    w3, b3 = prep["w3"], prep["b3"]
    s_pad, hidden = w1.shape
    a_pad = w3.shape[1]

    # Batch tiling: TILE_B rows per grid step (multiple of 8).
    tile_b = max(8, min(int(tile_b), _round_up(B, 8)))
    b_pad = _round_up(B, tile_b)
    grid = (b_pad // tile_b,)

    x = state.astype(jnp.float32)
    if (b_pad, s_pad) != (B, state_dim):
        x = jnp.pad(x, ((0, b_pad - B), (0, s_pad - state_dim)))

    w_bytes = jnp.dtype(w1.dtype).itemsize
    flops = 2 * b_pad * (s_pad * hidden + hidden * hidden + hidden * a_pad)
    transcendentals = 2 * b_pad * hidden  # two tanh layers
    bytes_accessed = (
        4 * b_pad * s_pad                                              # state
        + w_bytes * (s_pad * hidden + hidden * hidden + hidden * a_pad)  # W
        + 4 * (2 * hidden + a_pad)                                     # biases
        + 4 * b_pad * a_pad                                            # mean
    )

    rep = lambda i: (0, 0)  # weights/biases: same block every step (VMEM-resident)
    mean_pad = pl.pallas_call(
        _policy_kernel,
        out_shape=jax.ShapeDtypeStruct((b_pad, a_pad), jnp.float32),
        grid=grid,
        in_specs=[
            pl.BlockSpec((tile_b, s_pad), lambda i: (i, 0)),
            pl.BlockSpec((s_pad, hidden), rep),
            pl.BlockSpec((1, hidden), rep),
            pl.BlockSpec((hidden, hidden), rep),
            pl.BlockSpec((1, hidden), rep),
            pl.BlockSpec((hidden, a_pad), rep),
            pl.BlockSpec((1, a_pad), rep),
        ],
        out_specs=pl.BlockSpec((tile_b, a_pad), lambda i: (i, 0)),
        compiler_params=pltpu.CompilerParams(
            dimension_semantics=("parallel",)),
        cost_estimate=pl.CostEstimate(
            flops=flops,
            transcendentals=transcendentals,
            bytes_accessed=bytes_accessed),
    )(x, w1, b1, w2, b2, w3, b3)

    mean = mean_pad[:B, :action_dim]
    # std = exp(log_std) is batch-invariant: computed outside the kernel.
    std = jnp.broadcast_to(jnp.exp(prep["log_std"][:, :action_dim]),
                           (B, action_dim))
    return mean, std


if __name__ == "__main__":
    # Small but representative shapes: rollout-sized batch, module defaults.
    batch = 256
    state_dim = 16
    action_dim = 4
    hidden_dim = 128  # module default

    key = jax.random.PRNGKey(0)
    k_params, k_state = jax.random.split(key)
    params = init_params(k_params, state_dim, action_dim, hidden_dim,
                         log_std_init=0.0)
    state = jax.random.normal(k_state, (batch, state_dim), jnp.float32)

    # Plain-JAX reference (same math as the PyTorch module).
    h = jnp.tanh(state @ params["w1"] + params["b1"])
    h = jnp.tanh(h @ params["w2"] + params["b2"])
    mean_ref = h @ params["w3"] + params["b3"]
    std_ref = jnp.broadcast_to(jnp.exp(params["log_std"]), mean_ref.shape)

    # --- f32 path (matches PyTorch math; right choice for v5e) ---
    prep_f32 = prepare_params(params, compute_dtype=jnp.float32)
    fwd_f32 = jax.jit(lambda s: policy_forward(s, prep_f32, tile_b=64))
    mean, std = fwd_f32(state)
    jax.block_until_ready((mean, std))

    assert mean.shape == (batch, action_dim) and std.shape == (batch, action_dim)
    assert jnp.allclose(mean, mean_ref, atol=2e-3, rtol=2e-3)
    assert jnp.allclose(std, std_ref, atol=1e-5)

    # --- bf16-weight path (v6e/v7x MXU-native; f32 accumulation) ---
    prep_bf16 = prepare_params(params, compute_dtype=jnp.bfloat16)
    fwd_bf16 = jax.jit(lambda s: policy_forward(s, prep_bf16, tile_b=64))
    mean_bf16, std_bf16 = fwd_bf16(state)
    jax.block_until_ready((mean_bf16, std_bf16))
    assert mean_bf16.shape == (batch, action_dim)
    assert jnp.allclose(mean_bf16, mean_ref, atol=5e-2, rtol=5e-2)

    # TODO(synk): Policy.sample() (Normal rsample / log_prob) is not part of
    # forward() and is left to plain JAX.

    print("KERNEL_OK")
</pallas_src>

<mosaic_0001>
module attributes {stable_mosaic.version = 11 : i64} {
  func.func @_policy_kernel(%arg0: i32, %arg1: memref<64x128xf32, #tpu.memory_space<vmem>>, %arg2: memref<128x128xf32, #tpu.memory_space<vmem>>, %arg3: memref<1x128xf32, #tpu.memory_space<vmem>>, %arg4: memref<128x128xf32, #tpu.memory_space<vmem>>, %arg5: memref<1x128xf32, #tpu.memory_space<vmem>>, %arg6: memref<128x128xf32, #tpu.memory_space<vmem>>, %arg7: memref<1x128xf32, #tpu.memory_space<vmem>>, %arg8: memref<64x128xf32, #tpu.memory_space<vmem>>) attributes {dimension_semantics = [#tpu.dimension_semantics<parallel>], iteration_bounds = array<i64: 4>, scalar_prefetch = 0 : i64, scratch_operands = 0 : i64, tpu.core_type = #tpu.core_type<tc>, window_params = [{transform_indices = @transform_0, window_bounds = array<i64: 64, 128>}, {pipeline_mode = #tpu.pipeline_mode<synchronous>, transform_indices = @transform_1, window_bounds = array<i64: 128, 128>}, {pipeline_mode = #tpu.pipeline_mode<synchronous>, transform_indices = @transform_2, window_bounds = array<i64: 1, 128>}, {pipeline_mode = #tpu.pipeline_mode<synchronous>, transform_indices = @transform_3, window_bounds = array<i64: 128, 128>}, {pipeline_mode = #tpu.pipeline_mode<synchronous>, transform_indices = @transform_4, window_bounds = array<i64: 1, 128>}, {pipeline_mode = #tpu.pipeline_mode<synchronous>, transform_indices = @transform_5, window_bounds = array<i64: 128, 128>}, {pipeline_mode = #tpu.pipeline_mode<synchronous>, transform_indices = @transform_6, window_bounds = array<i64: 1, 128>}, {transform_indices = @transform_7, window_bounds = array<i64: 64, 128>}]} {
    %c0 = arith.constant 0 : index
    %c0_0 = arith.constant 0 : index
    %0 = vector.load %arg1[%c0, %c0_0] : memref<64x128xf32, #tpu.memory_space<vmem>>, vector<64x128xf32>
    %c0_1 = arith.constant 0 : index
    %c0_2 = arith.constant 0 : index
    %1 = vector.load %arg2[%c0_1, %c0_2] : memref<128x128xf32, #tpu.memory_space<vmem>>, vector<128x128xf32>
    %cst = arith.constant dense<0.000000e+00> : vector<64x128xf32>
    %2 = tpu.matmul %0, %1, %cst {dimension_numbers = #tpu.dot_dimension_numbers<[1], [0], [0], [1], [0, 0, 1, 1], [], []>} : vector<64x128xf32>, vector<128x128xf32>, vector<64x128xf32> -> vector<64x128xf32>
    %c0_3 = arith.constant 0 : index
    %c0_4 = arith.constant 0 : index
    %3 = vector.load %arg3[%c0_3, %c0_4] : memref<1x128xf32, #tpu.memory_space<vmem>>, vector<1x128xf32>
    %4 = vector.broadcast %3 : vector<1x128xf32> to vector<64x128xf32>
    %5 = arith.addf %2, %4 : vector<64x128xf32>
    %6 = math.tanh %5 : vector<64x128xf32>
    %c0_5 = arith.constant 0 : index
    %c0_6 = arith.constant 0 : index
    %7 = vector.load %arg4[%c0_5, %c0_6] : memref<128x128xf32, #tpu.memory_space<vmem>>, vector<128x128xf32>
    %cst_7 = arith.constant dense<0.000000e+00> : vector<64x128xf32>
    %8 = tpu.matmul %6, %7, %cst_7 {dimension_numbers = #tpu.dot_dimension_numbers<[1], [0], [0], [1], [0, 0, 1, 1], [], []>} : vector<64x128xf32>, vector<128x128xf32>, vector<64x128xf32> -> vector<64x128xf32>
    %c0_8 = arith.constant 0 : index
    %c0_9 = arith.constant 0 : index
    %9 = vector.load %arg5[%c0_8, %c0_9] : memref<1x128xf32, #tpu.memory_space<vmem>>, vector<1x128xf32>
    %10 = vector.broadcast %9 : vector<1x128xf32> to vector<64x128xf32>
    %11 = arith.addf %8, %10 : vector<64x128xf32>
    %12 = math.tanh %11 : vector<64x128xf32>
    %c0_10 = arith.constant 0 : index
    %c0_11 = arith.constant 0 : index
    %13 = vector.load %arg6[%c0_10, %c0_11] : memref<128x128xf32, #tpu.memory_space<vmem>>, vector<128x128xf32>
    %cst_12 = arith.constant dense<0.000000e+00> : vector<64x128xf32>
    %14 = tpu.matmul %12, %13, %cst_12 {dimension_numbers = #tpu.dot_dimension_numbers<[1], [0], [0], [1], [0, 0, 1, 1], [], []>} : vector<64x128xf32>, vector<128x128xf32>, vector<64x128xf32> -> vector<64x128xf32>
    %c0_13 = arith.constant 0 : index
    %c0_14 = arith.constant 0 : index
    %15 = vector.load %arg7[%c0_13, %c0_14] : memref<1x128xf32, #tpu.memory_space<vmem>>, vector<1x128xf32>
    %16 = vector.broadcast %15 : vector<1x128xf32> to vector<64x128xf32>
    %17 = arith.addf %14, %16 : vector<64x128xf32>
    %c0_15 = arith.constant 0 : index
    %c0_16 = arith.constant 0 : index
    %18 = vector.load %arg8[%c0_15, %c0_16] : memref<64x128xf32, #tpu.memory_space<vmem>>, vector<64x128xf32>
    tpu.vector_store %arg8[%c0_15, %c0_16], %17 {strides = array<i32>} : memref<64x128xf32, #tpu.memory_space<vmem>>, vector<64x128xf32>,
    return
  }
  func.func @transform_0(%arg0: i32) -> (i32, i32) {
    %c0_i32 = arith.constant 0 : i32
    %c0_i32_0 = arith.constant 0 : i32
    return %arg0, %c0_i32 : i32, i32
  }
  func.func @transform_1(%arg0: i32) -> (i32, i32) {
    %c0_i32 = arith.constant 0 : i32
    %c0_i32_0 = arith.constant 0 : i32
    %c0_i32_1 = arith.constant 0 : i32
    return %c0_i32, %c0_i32_0 : i32, i32
  }
  func.func @transform_2(%arg0: i32) -> (i32, i32) {
    %c0_i32 = arith.constant 0 : i32
    %c0_i32_0 = arith.constant 0 : i32
    %c0_i32_1 = arith.constant 0 : i32
    return %c0_i32, %c0_i32_0 : i32, i32
  }
  func.func @transform_3(%arg0: i32) -> (i32, i32) {
    %c0_i32 = arith.constant 0 : i32
    %c0_i32_0 = arith.constant 0 : i32
    %c0_i32_1 = arith.constant 0 : i32
    return %c0_i32, %c0_i32_0 : i32, i32
  }
  func.func @transform_4(%arg0: i32) -> (i32, i32) {
    %c0_i32 = arith.constant 0 : i32
    %c0_i32_0 = arith.constant 0 : i32
    %c0_i32_1 = arith.constant 0 : i32
    return %c0_i32, %c0_i32_0 : i32, i32
  }
  func.func @transform_5(%arg0: i32) -> (i32, i32) {
    %c0_i32 = arith.constant 0 : i32
    %c0_i32_0 = arith.constant 0 : i32
    %c0_i32_1 = arith.constant 0 : i32
    return %c0_i32, %c0_i32_0 : i32, i32
  }
  func.func @transform_6(%arg0: i32) -> (i32, i32) {
    %c0_i32 = arith.constant 0 : i32
    %c0_i32_0 = arith.constant 0 : i32
    %c0_i32_1 = arith.constant 0 : i32
    return %c0_i32, %c0_i32_0 : i32, i32
  }
  func.func @transform_7(%arg0: i32) -> (i32, i32) {
    %c0_i32 = arith.constant 0 : i32
    %c0_i32_0 = arith.constant 0 : i32
    return %arg0, %c0_i32 : i32, i32
  }
}

</mosaic_0001>

<llo_original>
// kernel: _lambda_.1
$region0: #{_lambda_.1}
  #allocation0 [shape = 'u32[]', space=smem, size = 0x4, offset = 0x4, fixed_abs, tag = 'smem constant byte address 0x4 - core index']
  #allocation1 [shape = 'u32[144,128]{1,0:T(1,128)}', space=vmem, size = 0x12000, scoped, tag = 'internal scratch']
  %s0 = inlined_call_operand.vmem [shape: f32[256,128], index: 0, kind: input, shape index: {}]
  %s1 = inlined_call_operand.vmem [shape: f32[128,128], index: 1, kind: input, shape index: {}]
  %s2 = inlined_call_operand.vmem [shape: f32[1,128], index: 2, kind: input, shape index: {}]
  %s3 = inlined_call_operand.vmem [shape: f32[128,128], index: 3, kind: input, shape index: {}]
  %s4 = inlined_call_operand.vmem [shape: f32[1,128], index: 4, kind: input, shape index: {}]
  %s5 = inlined_call_operand.vmem [shape: f32[128,128], index: 5, kind: input, shape index: {}]
  %s6 = inlined_call_operand.vmem [shape: f32[1,128], index: 6, kind: input, shape index: {}]
  %s7 = inlined_call_operand.vmem [shape: f32[256,128], index: 7, kind: output, shape index: {}]
  %s8 = sld [smem:[#allocation0]]
  $region61: #{_lambda_.1} parent=0
    _
  %s10 = ssub.s32 1, %s8
  %s11 = scalar_select 0, %s10, %s8
  loop: start=0, step=1, limit=6
  $region2: #{_lambda_.1} parent=0 // loop_pre_header
    _
  $region3: #{_lambda_.1} parent=0 // loop_header
    %s13 = sphi 0, %s17
    %p14 = scmp.ge.s32.totalorder %s13, 6
    %s23 = sphi 0, %s25
    %s26 = sphi 0, %s23
    %s27 = sphi 0, %s26
    %s43 = sphi 0, %s27
    %s47 = sphi 0, %s47
    %s49 = sphi 0, %s47
    %s50 = sphi 0, %s49
    %s64 = sphi 0, %s50
    %s68 = sphi 0, %s68
    %s70 = sphi 0, %s68
    %s71 = sphi 0, %s70
    %s85 = sphi 0, %s71
    %s89 = sphi 0, %s89
    %s91 = sphi 0, %s89
    %s92 = sphi 0, %s91
    %s106 = sphi 0, %s92
    %s110 = sphi 0, %s110
    %s112 = sphi 0, %s110
    %s113 = sphi 0, %s112
    %s127 = sphi 0, %s113
    %s131 = sphi 0, %s131
    %s133 = sphi 0, %s131
    %s134 = sphi 0, %s133
    %s148 = sphi 0, %s134
    %s152 = sphi 0, %s152
    %s154 = sphi 0, %s152
    %s155 = sphi 0, %s154
    %s169 = sphi 0, %s155
    %s175 = sphi 0, %s177
    %s178 = sphi 0, %s175
    %s179 = sphi 0, %s178
    %s195 = sphi 0, %s179
  $region4: #{_lambda_.1} parent=0 // loop_header_branch
    %16 = sbr.rel (%p14) target = $region8
  $region5: #{_lambda_.1} parent=0 // loop_body
    %s18 = ssub.s32 %s13, 1
    %s19 = ssub.s32 %s13, 2
    %s20 = sadd.s32 %s13, 1
    %s21 = ssub.s32 %s13, %s20
    %p22 = scmp.eq.s32.totalorder %s21, 0
    %s24 = sadd.s32 %s23, 1
    %s25 = scalar_select %p22, %s23, %s24
    %p28 = pneg %p22
    %p29 = scmp.eq.s32.totalorder %s13, 3
    %p30 = por %p28, %p29
    %p31 = scmp.ne.s32.totalorder %s23, %s26
    %p32 = scmp.eq.s32.totalorder %s13, 0
    %p33 = por %p31, %p32
    %p34 = scmp.ne.s32.totalorder %s23, %s26
    %p35 = scmp.eq.s32.totalorder %s18, 3
    %p36 = por %p34, %p35
    %p37 = scmp.ne.s32.totalorder %s26, %s27
    %p38 = scmp.eq.s32.totalorder %s18, 0
    %p39 = por %p37, %p38
    %p40 = scmp.ne.s32.totalorder %s26, %s27
    %p41 = scmp.eq.s32.totalorder %s19, 3
    %p42 = por %p40, %p41
    %p44 = scmp.ne.s32.totalorder %s27, %s43
    %p45 = scmp.eq.s32.totalorder %s19, 0
    %p46 = por %p44, %p45
    %s48 = sadd.s32 %s47, 1
    %p51 = scmp.eq.s32.totalorder %s13, 3
    %p52 = scmp.ne.s32.totalorder %s47, %s49
    %p53 = scmp.eq.s32.totalorder %s13, 0
    %p54 = por %p52, %p53
    %p55 = scmp.ne.s32.totalorder %s47, %s49
    %p56 = scmp.eq.s32.totalorder %s18, 3
    %p57 = por %p55, %p56
    %p58 = scmp.ne.s32.totalorder %s49, %s50
    %p59 = scmp.eq.s32.totalorder %s18, 0
    %p60 = por %p58, %p59
    %p61 = scmp.ne.s32.totalorder %s49, %s50
    %p62 = scmp.eq.s32.totalorder %s19, 3
    %p63 = por %p61, %p62
    %p65 = scmp.ne.s32.totalorder %s50, %s64
    %p66 = scmp.eq.s32.totalorder %s19, 0
    %p67 = por %p65, %p66
    %s69 = sadd.s32 %s68, 1
    %p72 = scmp.eq.s32.totalorder %s13, 3
    %p73 = scmp.ne.s32.totalorder %s68, %s70
    %p74 = scmp.eq.s32.totalorder %s13, 0
    %p75 = por %p73, %p74
    %p76 = scmp.ne.s32.totalorder %s68, %s70
    %p77 = scmp.eq.s32.totalorder %s18, 3
    %p78 = por %p76, %p77
    %p79 = scmp.ne.s32.totalorder %s70, %s71
    %p80 = scmp.eq.s32.totalorder %s18, 0
    %p81 = por %p79, %p80
    %p82 = scmp.ne.s32.totalorder %s70, %s71
    %p83 = scmp.eq.s32.totalorder %s19, 3
    %p84 = por %p82, %p83
    %p86 = scmp.ne.s32.totalorder %s71, %s85
    %p87 = scmp.eq.s32.totalorder %s19, 0
    %p88 = por %p86, %p87
    %s90 = sadd.s32 %s89, 1
    %p93 = scmp.eq.s32.totalorder %s13, 3
    %p94 = scmp.ne.s32.totalorder %s89, %s91
    %p95 = scmp.eq.s32.totalorder %s13, 0
    %p96 = por %p94, %p95
    %p97 = scmp.ne.s32.totalorder %s89, %s91
    %p98 = scmp.eq.s32.totalorder %s18, 3
    %p99 = por %p97, %p98
    %p100 = scmp.ne.s32.totalorder %s91, %s92
    %p101 = scmp.eq.s32.totalorder %s18, 0
    %p102 = por %p100, %p101
    %p103 = scmp.ne.s32.totalorder %s91, %s92
    %p104 = scmp.eq.s32.totalorder %s19, 3
    %p105 = por %p103, %p104
    %p107 = scmp.ne.s32.totalorder %s92, %s106
    %p108 = scmp.eq.s32.totalorder %s19, 0
    %p109 = por %p107, %p108
    %s111 = sadd.s32 %s110, 1
    %p114 = scmp.eq.s32.totalorder %s13, 3
    %p115 = scmp.ne.s32.totalorder %s110, %s112
    %p116 = scmp.eq.s32.totalorder %s13, 0
    %p117 = por %p115, %p116
    %p118 = scmp.ne.s32.totalorder %s110, %s112
    %p119 = scmp.eq.s32.totalorder %s18, 3
    %p120 = por %p118, %p119
    %p121 = scmp.ne.s32.totalorder %s112, %s113
    %p122 = scmp.eq.s32.totalorder %s18, 0
    %p123 = por %p121, %p122
    %p124 = scmp.ne.s32.totalorder %s112, %s113
    %p125 = scmp.eq.s32.totalorder %s19, 3
    %p126 = por %p124, %p125
    %p128 = scmp.ne.s32.totalorder %s113, %s127
    %p129 = scmp.eq.s32.totalorder %s19, 0
    %p130 = por %p128, %p129
    %s132 = sadd.s32 %s131, 1
    %p135 = scmp.eq.s32.totalorder %s13, 3
    %p136 = scmp.ne.s32.totalorder %s131, %s133
    %p137 = scmp.eq.s32.totalorder %s13, 0
    %p138 = por %p136, %p137
    %p139 = scmp.ne.s32.totalorder %s131, %s133
    %p140 = scmp.eq.s32.totalorder %s18, 3
    %p141 = por %p139, %p140
    %p142 = scmp.ne.s32.totalorder %s133, %s134
    %p143 = scmp.eq.s32.totalorder %s18, 0
    %p144 = por %p142, %p143
    %p145 = scmp.ne.s32.totalorder %s133, %s134
    %p146 = scmp.eq.s32.totalorder %s19, 3
    %p147 = por %p145, %p146
    %p149 = scmp.ne.s32.totalorder %s134, %s148
    %p150 = scmp.eq.s32.totalorder %s19, 0
    %p151 = por %p149, %p150
    %s153 = sadd.s32 %s152, 1
    %p156 = scmp.eq.s32.totalorder %s13, 3
    %p157 = scmp.ne.s32.totalorder %s152, %s154
    %p158 = scmp.eq.s32.totalorder %s13, 0
    %p159 = por %p157, %p158
    %p160 = scmp.ne.s32.totalorder %s152, %s154
    %p161 = scmp.eq.s32.totalorder %s18, 3
    %p162 = por %p160, %p161
    %p163 = scmp.ne.s32.totalorder %s154, %s155
    %p164 = scmp.eq.s32.totalorder %s18, 0
    %p165 = por %p163, %p164
    %p166 = scmp.ne.s32.totalorder %s154, %s155
    %p167 = scmp.eq.s32.totalorder %s19, 3
    %p168 = por %p166, %p167
    %p170 = scmp.ne.s32.totalorder %s155, %s169
    %p171 = scmp.eq.s32.totalorder %s19, 0
    %p172 = por %p170, %p171
    %s173 = ssub.s32 %s13, %s20
    %p174 = scmp.eq.s32.totalorder %s173, 0
    %s176 = sadd.s32 %s175, 1
    %s177 = scalar_select %p174, %s175, %s176
    %p180 = pneg %p174
    %p181 = scmp.eq.s32.totalorder %s13, 3
    %p182 = por %p180, %p181
    %p183 = scmp.ne.s32.totalorder %s175, %s178
    %p184 = scmp.eq.s32.totalorder %s13, 0
    %p185 = por %p183, %p184
    %p186 = scmp.ne.s32.totalorder %s175, %s178
    %p187 = scmp.eq.s32.totalorder %s18, 3
    %p188 = por %p186, %p187
    %p189 = scmp.ne.s32.totalorder %s178, %s179
    %p190 = scmp.eq.s32.totalorder %s18, 0
    %p191 = por %p189, %p190
    %p192 = scmp.ne.s32.totalorder %s178, %s179
    %p193 = scmp.eq.s32.totalorder %s19, 3
    %p194 = por %p192, %p193
    %p196 = scmp.ne.s32.totalorder %s179, %s195
    %p197 = scmp.eq.s32.totalorder %s19, 0
    %p198 = por %p196, %p197
    %p199 = scmp.le.s32.totalorder 1, %s13
    %p200 = scmp.lt.s32.totalorder %s13, 5
    %p201 = pnand %p199, %p200
    %p202 = pneg %p201
    // Predicated region
    $region9: #{_lambda_.1} parent=5 // pred_check
      _
    $region10: #{_lambda_.1} parent=5 // pred_check_branch
      %204 = sbr.rel (%p201) target = $region12
    $region11: #{_lambda_.1} parent=5 // pred_region
      %s205 = ssub.s32 %s13, 1
      // Predicated region
      $region13: #{_lambda_.1} parent=11 // pred_check
        %p206 = pneg %p60
      $region14: #{_lambda_.1} parent=11 // pred_check_branch
        %208 = sbr.rel (%p206) target = $region16
      $region15: #{_lambda_.1} parent=11 // pred_region
        _
      $region16: #{_lambda_.1} parent=11 // pred_fallthru
        _
      // Predicated region
      $region17: #{_lambda_.1} parent=11 // pred_check
        %p209 = pneg %p81
      $region18: #{_lambda_.1} parent=11 // pred_check_branch
        %211 = sbr.rel (%p209) target = $region20
      $region19: #{_lambda_.1} parent=11 // pred_region
        _
      $region20: #{_lambda_.1} parent=11 // pred_fallthru
        _
      // Predicated region
      $region21: #{_lambda_.1} parent=11 // pred_check
        %p212 = pneg %p102
      $region22: #{_lambda_.1} parent=11 // pred_check_branch
        %214 = sbr.rel (%p212) target = $region24
      $region23: #{_lambda_.1} parent=11 // pred_region
        _
      $region24: #{_lambda_.1} parent=11 // pred_fallthru
        _
      // Predicated region
      $region25: #{_lambda_.1} parent=11 // pred_check
        %p215 = pneg %p123
      $region26: #{_lambda_.1} parent=11 // pred_check_branch
        %217 = sbr.rel (%p215) target = $region28
      $region27: #{_lambda_.1} parent=11 // pred_region
        _
      $region28: #{_lambda_.1} parent=11 // pred_fallthru
        _
      // Predicated region
      $region29: #{_lambda_.1} parent=11 // pred_check
        %p218 = pneg %p144
      $region30: #{_lambda_.1} parent=11 // pred_check_branch
        %220 = sbr.rel (%p218) target = $region32
      $region31: #{_lambda_.1} parent=11 // pred_region
        _
      $region32: #{_lambda_.1} parent=11 // pred_fallthru
        _
      // Predicated region
      $region33: #{_lambda_.1} parent=11 // pred_check
        %p221 = pneg %p165
      $region34: #{_lambda_.1} parent=11 // pred_check_branch
        %223 = sbr.rel (%p221) target = $region36
      $region35: #{_lambda_.1} parent=11 // pred_region
        _
      $region36: #{_lambda_.1} parent=11 // pred_fallthru
        _
    $region12: #{_lambda_.1} parent=5 // pred_fallthru
      _
    %p224 = scmp.lt.s32.totalorder %s13, 4
    // Predicated region
    $region37: #{_lambda_.1} parent=5 // pred_check
      %p225 = pneg %p224
    $region38: #{_lambda_.1} parent=5 // pred_check_branch
      %227 = sbr.rel (%p225) target = $region40
    $region39: #{_lambda_.1} parent=5 // pred_region
      // Predicated region
      $region41: #{_lambda_.1} parent=39 // pred_check
        %p228 = pneg %p33
      $region42: #{_lambda_.1} parent=39 // pred_check_branch
        %230 = sbr.rel (%p228) target = $region44
      $region43: #{_lambda_.1} parent=39 // pred_region
        %s231 = smul.u32 8, %s13
        %p232 = scmp.lt.s32.totalorder %s231, 31
        %s233 = scalar_select %p232, %s231, 31
        %s234 = smul.addr %s233, 8
        %s235 = scalar_lea.vmem %s0, %s234
        %s236 = smul.u32 8, %s13
      $region44: #{_lambda_.1} parent=39 // pred_fallthru
        _
    $region40: #{_lambda_.1} parent=5 // pred_fallthru
      _
    %p237 = scmp.le.s32.totalorder 1, %s13
    %p238 = scmp.lt.s32.totalorder %s13, 5
    %p239 = pnand %p237, %p238
    %p240 = pneg %p239
    // Predicated region
    $region45: #{_lambda_.1} parent=5 // pred_check
      _
    $region46: #{_lambda_.1} parent=5 // pred_check_branch
      %242 = sbr.rel (%p239) target = $region48
    $region47: #{_lambda_.1} parent=5 // pred_region
      %s243 = ssub.s32 %s13, 1
      %s244 = smul.u32 8, %s18
      %p245 = scmp.lt.s32.totalorder %s244, 31
      %s246 = scalar_select %p245, %s244, 31
      %s247 = smul.addr %s246, 8
      %s248 = scalar_lea.vmem %s0, %s247
      %p249 = pneg %p39
      %p250 = pneg %p36
      %p251 = pneg %p60
      %p252 = pneg %p57
      %p253 = pneg %p81
      %p254 = pneg %p78
      %p255 = pneg %p102
      %p256 = pneg %p99
      %p257 = pneg %p123
      %p258 = pneg %p120
      %p259 = pneg %p144
      %p260 = pneg %p141
      %p261 = pneg %p165
      %p262 = pneg %p162
      %p263 = pneg %p191
      %p264 = pneg %p188
      %s265 = smul.u32 8, %s18
      %p266 = scmp.lt.s32.totalorder %s265, 31
      %s267 = scalar_select %p266, %s265, 31
      %s268 = smul.addr %s267, 8
      %s269 = scalar_lea.vmem %s7, %s268
      %s270 = smul.u32 8, %s18
      %p271 = scmp.lt.s32.totalorder %s270, 31
      %s272 = scalar_select %p271, %s270, 31
      %s273 = smul.addr %s272, 8
      %s274 = scalar_lea.vmem %s0, %s273
      %s275 = smul.u32 8, %s18
      %s276 = smul.u32 8, %s18
      %p277 = scmp.lt.s32.totalorder %s276, 31
      %s278 = scalar_select %p277, %s276, 31
      %s279 = smul.addr %s278, 8
      %s280 = scalar_lea.vmem %s7, %s279
      %s281 = smul.u32 8, %s18
      %v282 = vld [vmem:[%s274] sm:$0xff]
      %v283 = vld [vmem:[%s274 + $0x8] sm:$0xff]
      %v284 = vld [vmem:[%s274 + $0x10] sm:$0xff]
      %v285 = vld [vmem:[%s274 + $0x18] sm:$0xff]
      %v286 = vld [vmem:[%s274 + $0x20] sm:$0xff]
      %v287 = vld [vmem:[%s274 + $0x28] sm:$0xff]
      %v288 = vld [vmem:[%s274 + $0x30] sm:$0xff]
      %v289 = vld [vmem:[%s274 + $0x38] sm:$0xff]
      %v290 = vld [vmem:[%s1] sm:$0xff]
      %v291 = vld [vmem:[%s1 + $0x8] sm:$0xff]
      %v292 = vld [vmem:[%s1 + $0x10] sm:$0xff]
      %v293 = vld [vmem:[%s1 + $0x18] sm:$0xff]
      %v294 = vld [vmem:[%s1 + $0x20] sm:$0xff]
      %v295 = vld [vmem:[%s1 + $0x28] sm:$0xff]
      %v296 = vld [vmem:[%s1 + $0x30] sm:$0xff]
      %v297 = vld [vmem:[%s1 + $0x38] sm:$0xff]
      %v298 = vld [vmem:[%s1 + $0x40] sm:$0xff]
      %v299 = vld [vmem:[%s1 + $0x48] sm:$0xff]
      %v300 = vld [vmem:[%s1 + $0x50] sm:$0xff]
      %v301 = vld [vmem:[%s1 + $0x58] sm:$0xff]
      %v302 = vld [vmem:[%s1 + $0x60] sm:$0xff]
      %v303 = vld [vmem:[%s1 + $0x68] sm:$0xff]
      %v304 = vld [vmem:[%s1 + $0x70] sm:$0xff]
      %v305 = vld [vmem:[%s1 + $0x78] sm:$0xff]
      %v306 = vld [vmem:[%s2] sm:$0x1]
      %v308 = vlaneseq
      %v309 = vshrl.u32 %v308, 7
      %v310 = vsub.s32 0, %v309
      %v311 = vrot.slane %v306, %v310
      %313 = vmatprep.subr.mxu0 0.0
      %314 = vmatpush1.msra.mxu0 %v290
      %315 = vmatprep.subr.mxu0 0.0
      %316 = vmatpush1.msra.mxu0 %v291
      %317 = vmatprep.subr.mxu0 0.0
      %318 = vmatpush1.msra.mxu0 %v292
      %319 = vmatprep.subr.mxu0 0.0
      %320 = vmatpush1.msra.mxu0 %v293
      %321 = vmatprep.subr.mxu0 0.0
      %322 = vmatpush1.msra.mxu0 %v294
      %323 = vmatprep.subr.mxu0 0.0
      %324 = vmatpush1.msra.mxu0 %v295
      %325 = vmatprep.subr.mxu0 0.0
      %326 = vmatpush1.msra.mxu0 %v296
      %327 = vmatprep.subr.mxu0 0.0
      %328 = vmatpush1.msra.mxu0 %v297
      %329 = vmatprep.subr.mxu0 0.0
      %330 = vmatpush1.msra.mxu0 %v298
      %331 = vmatprep.subr.mxu0 0.0
      %332 = vmatpush1.msra.mxu0 %v299
      %333 = vmatprep.subr.mxu0 0.0
      %334 = vmatpush1.msra.mxu0 %v300
      %335 = vmatprep.subr.mxu0 0.0
      %336 = vmatpush1.msra.mxu0 %v301
      %337 = vmatprep.subr.mxu0 0.0
      %338 = vmatpush1.msra.mxu0 %v302
      %339 = vmatprep.subr.mxu0 0.0
      %340 = vmatpush1.msra.mxu0 %v303
      %341 = vmatprep.subr.mxu0 0.0
      %342 = vmatpush1.msra.mxu0 %v304
      %343 = vmatprep.subr.mxu0 0.0
      %344 = vmatpush1.msra.mxu0 %v305
      %345 = vmatprep.subr.mxu0 0.0
      %346 = vmatpush1.msra.mxu0 0.0
      %347 = vmatprep.subr.mxu0 0.0
      %348 = vmatpush1.msra.mxu0 0.0
      %349 = vmatprep.subr.mxu0 0.0
      %350 = vmatpush1.msra.mxu0 0.0
      %351 = vmatprep.subr.mxu0 0.0
      %352 = vmatpush1.msra.mxu0 0.0
      %353 = vmatprep.subr.mxu0 0.0
      %354 = vmatpush1.msra.mxu0 0.0
      %355 = vmatprep.subr.mxu0 0.0
      %356 = vmatpush1.msra.mxu0 0.0
      %357 = vmatprep.subr.mxu0 0.0
      %358 = vmatpush1.msra.mxu0 0.0
      %359 = vmatprep.subr.mxu0 0.0
      %360 = vmatpush1.msra.mxu0 0.0
      %361 = vmatprep.subr.mxu0 0.0
      %362 = vmatpush1.msra.mxu0 0.0
      %363 = vmatprep.subr.mxu0 0.0
      %364 = vmatpush1.msra.mxu0 0.0
      %365 = vmatprep.subr.mxu0 0.0
      %366 = vmatpush1.msra.mxu0 0.0
      %367 = vmatprep.subr.mxu0 0.0
      %368 = vmatpush1.msra.mxu0 0.0
      %369 = vmatprep.subr.mxu0 0.0
      %370 = vmatpush1.msra.mxu0 0.0
      %371 = vmatprep.subr.mxu0 0.0
      %372 = vmatpush1.msra.mxu0 0.0
      %373 = vmatprep.subr.mxu0 0.0
      %374 = vmatpush1.msra.mxu0 0.0
      %375 = vmatprep.subr.mxu0 0.0
      %376 = vmatpush1.msra.mxu0 0.0
      %377 = vmatprep.mubr.f32.mxu0 0.0
      %378 = vmatmul.mubr.f32.gmra.mrb[0].mxu0 %v282
      %v379 = vpop.f32.mrb[0].mxu0
      %v380 = vadd.f32 %v311, %v379
      %v381 = vpop.f32.mrb[0].mxu0
      %382 = vmatprep.mubr.f32.mxu0 0.0
      %383 = vmatmul.mubr.f32.gmra.mrb[0].mxu0 %v283
      %v384 = vpop.f32.mrb[0].mxu0
      %v385 = vadd.f32 %v311, %v384
      %v386 = vpop.f32.mrb[0].mxu0
      %387 = vmatprep.mubr.f32.mxu0 0.0
      %388 = vmatmul.mubr.f32.gmra.mrb[0].mxu0 %v284
      %v389 = vpop.f32.mrb[0].mxu0
      %v390 = vadd.f32 %v311, %v389
      %v391 = vpop.f32.mrb[0].mxu0
      %392 = vmatprep.mubr.f32.mxu0 0.0
      %393 = vmatmul.mubr.f32.gmra.mrb[0].mxu0 %v285
      %v394 = vpop.f32.mrb[0].mxu0
      %v395 = vadd.f32 %v311, %v394
      %v396 = vpop.f32.mrb[0].mxu0
      %397 = vmatprep.mubr.f32.mxu0 0.0
      %398 = vmatmul.mubr.f32.gmra.mrb[0].mxu0 %v286
      %v399 = vpop.f32.mrb[0].mxu0
      %v400 = vadd.f32 %v311, %v399
      %v401 = vpop.f32.mrb[0].mxu0
      %402 = vmatprep.mubr.f32.mxu0 0.0
      %403 = vmatmul.mubr.f32.gmra.mrb[0].mxu0 %v287
      %v404 = vpop.f32.mrb[0].mxu0
      %v405 = vadd.f32 %v311, %v404
      %v406 = vpop.f32.mrb[0].mxu0
      %407 = vmatprep.mubr.f32.mxu0 0.0
      %408 = vmatmul.mubr.f32.gmra.mrb[0].mxu0 %v288
      %v409 = vpop.f32.mrb[0].mxu0
      %v410 = vadd.f32 %v311, %v409
      %v411 = vpop.f32.mrb[0].mxu0
      %412 = vmatprep.mubr.f32.mxu0 0.0
      %413 = vmatmul.mubr.f32.gmra.mrb[0].mxu0 %v289
      %v414 = vpop.f32.mrb[0].mxu0
      %v415 = vadd.f32 %v311, %v414
      %v416 = vpop.f32.mrb[0].mxu0
      %417 = vdwg.mxu0
      %v418 = vtanh.pop %v380
      %v419 = vtanh.pop %v385
      %v420 = vtanh.pop %v390
      %v421 = vtanh.pop %v395
      %v422 = vtanh.pop %v400
      %v423 = vtanh.pop %v405
      %v424 = vtanh.pop %v410
      %v425 = vtanh.pop %v415
      %v426 = vld [vmem:[%s3] sm:$0xff]
      %v427 = vld [vmem:[%s3 + $0x8] sm:$0xff]
      %v428 = vld [vmem:[%s3 + $0x10] sm:$0xff]
      %v429 = vld [vmem:[%s3 + $0x18] sm:$0xff]
      %v430 = vld [vmem:[%s3 + $0x20] sm:$0xff]
      %v431 = vld [vmem:[%s3 + $0x28] sm:$0xff]
      %v432 = vld [vmem:[%s3 + $0x30] sm:$0xff]
      %v433 = vld [vmem:[%s3 + $0x38] sm:$0xff]
      %v434 = vld [vmem:[%s3 + $0x40] sm:$0xff]
      %v435 = vld [vmem:[%s3 + $0x48] sm:$0xff]
      %v436 = vld [vmem:[%s3 + $0x50] sm:$0xff]
      %v437 = vld [vmem:[%s3 + $0x58] sm:$0xff]
      %v438 = vld [vmem:[%s3 + $0x60] sm:$0xff]
      %v439 = vld [vmem:[%s3 + $0x68] sm:$0xff]
      %v440 = vld [vmem:[%s3 + $0x70] sm:$0xff]
      %v441 = vld [vmem:[%s3 + $0x78] sm:$0xff]
      %v442 = vld [vmem:[%s4] sm:$0x1]
      %v444 = vlaneseq
      %v445 = vshrl.u32 %v444, 7
      %v446 = vsub.s32 0, %v445
      %v447 = vrot.slane %v442, %v446
      %449 = vmatprep.subr.mxu0 0.0
      %450 = vmatpush1.msra.mxu0 %v426
      %451 = vmatprep.subr.mxu0 0.0
      %452 = vmatpush1.msra.mxu0 %v427
      %453 = vmatprep.subr.mxu0 0.0
      %454 = vmatpush1.msra.mxu0 %v428
      %455 = vmatprep.subr.mxu0 0.0
      %456 = vmatpush1.msra.mxu0 %v429
      %457 = vmatprep.subr.mxu0 0.0
      %458 = vmatpush1.msra.mxu0 %v430
      %459 = vmatprep.subr.mxu0 0.0
      %460 = vmatpush1.msra.mxu0 %v431
      %461 = vmatprep.subr.mxu0 0.0
      %462 = vmatpush1.msra.mxu0 %v432
      %463 = vmatprep.subr.mxu0 0.0
      %464 = vmatpush1.msra.mxu0 %v433
      %465 = vmatprep.subr.mxu0 0.0
      %466 = vmatpush1.msra.mxu0 %v434
      %467 = vmatprep.subr.mxu0 0.0
      %468 = vmatpush1.msra.mxu0 %v435
      %469 = vmatprep.subr.mxu0 0.0
      %470 = vmatpush1.msra.mxu0 %v436
      %471 = vmatprep.subr.mxu0 0.0
      %472 = vmatpush1.msra.mxu0 %v437
      %473 = vmatprep.subr.mxu0 0.0
      %474 = vmatpush1.msra.mxu0 %v438
      %475 = vmatprep.subr.mxu0 0.0
      %476 = vmatpush1.msra.mxu0 %v439
      %477 = vmatprep.subr.mxu0 0.0
      %478 = vmatpush1.msra.mxu0 %v440
      %479 = vmatprep.subr.mxu0 0.0
      %480 = vmatpush1.msra.mxu0 %v441
      %481 = vmatprep.subr.mxu0 0.0
      %482 = vmatpush1.msra.mxu0 0.0
      %483 = vmatprep.subr.mxu0 0.0
      %484 = vmatpush1.msra.mxu0 0.0
      %485 = vmatprep.subr.mxu0 0.0
      %486 = vmatpush1.msra.mxu0 0.0
      %487 = vmatprep.subr.mxu0 0.0
      %488 = vmatpush1.msra.mxu0 0.0
      %489 = vmatprep.subr.mxu0 0.0
      %490 = vmatpush1.msra.mxu0 0.0
      %491 = vmatprep.subr.mxu0 0.0
      %492 = vmatpush1.msra.mxu0 0.0
      %493 = vmatprep.subr.mxu0 0.0
      %494 = vmatpush1.msra.mxu0 0.0
      %495 = vmatprep.subr.mxu0 0.0
      %496 = vmatpush1.msra.mxu0 0.0
      %497 = vmatprep.subr.mxu0 0.0
      %498 = vmatpush1.msra.mxu0 0.0
      %499 = vmatprep.subr.mxu0 0.0
      %500 = vmatpush1.msra.mxu0 0.0
      %501 = vmatprep.subr.mxu0 0.0
      %502 = vmatpush1.msra.mxu0 0.0
      %503 = vmatprep.subr.mxu0 0.0
      %504 = vmatpush1.msra.mxu0 0.0
      %505 = vmatprep.subr.mxu0 0.0
      %506 = vmatpush1.msra.mxu0 0.0
      %507 = vmatprep.subr.mxu0 0.0
      %508 = vmatpush1.msra.mxu0 0.0
      %509 = vmatprep.subr.mxu0 0.0
      %510 = vmatpush1.msra.mxu0 0.0
      %511 = vmatprep.subr.mxu0 0.0
      %512 = vmatpush1.msra.mxu0 0.0
      %513 = vmatprep.mubr.f32.mxu0 0.0
      %514 = vmatmul.mubr.f32.gmra.mrb[0].mxu0 %v418
      %v515 = vpop.f32.mrb[0].mxu0
      %v516 = vadd.f32 %v447, %v515
      %v517 = vpop.f32.mrb[0].mxu0
      %518 = vmatprep.mubr.f32.mxu0 0.0
      %519 = vmatmul.mubr.f32.gmra.mrb[0].mxu0 %v419
      %v520 = vpop.f32.mrb[0].mxu0
      %v521 = vadd.f32 %v447, %v520
      %v522 = vpop.f32.mrb[0].mxu0
      %523 = vmatprep.mubr.f32.mxu0 0.0
      %524 = vmatmul.mubr.f32.gmra.mrb[0].mxu0 %v420
      %v525 = vpop.f32.mrb[0].mxu0
      %v526 = vadd.f32 %v447, %v525
      %v527 = vpop.f32.mrb[0].mxu0
      %528 = vmatprep.mubr.f32.mxu0 0.0
      %529 = vmatmul.mubr.f32.gmra.mrb[0].mxu0 %v421
      %v530 = vpop.f32.mrb[0].mxu0
      %v531 = vadd.f32 %v447, %v530
      %v532 = vpop.f32.mrb[0].mxu0
      %533 = vmatprep.mubr.f32.mxu0 0.0
      %534 = vmatmul.mubr.f32.gmra.mrb[0].mxu0 %v422
      %v535 = vpop.f32.mrb[0].mxu0
      %v536 = vadd.f32 %v447, %v535
      %v537 = vpop.f32.mrb[0].mxu0
      %538 = vmatprep.mubr.f32.mxu0 0.0
      %539 = vmatmul.mubr.f32.gmra.mrb[0].mxu0 %v423
      %v540 = vpop.f32.mrb[0].mxu0
      %v541 = vadd.f32 %v447, %v540
      %v542 = vpop.f32.mrb[0].mxu0
      %543 = vmatprep.mubr.f32.mxu0 0.0
      %544 = vmatmul.mubr.f32.gmra.mrb[0].mxu0 %v424
      %v545 = vpop.f32.mrb[0].mxu0
      %v546 = vadd.f32 %v447, %v545
      %v547 = vpop.f32.mrb[0].mxu0
      %548 = vmatprep.mubr.f32.mxu0 0.0
      %549 = vmatmul.mubr.f32.gmra.mrb[0].mxu0 %v425
      %v550 = vpop.f32.mrb[0].mxu0
      %v551 = vadd.f32 %v447, %v550
      %v552 = vpop.f32.mrb[0].mxu0
      %553 = vdwg.mxu0
      %v554 = vtanh.pop %v516
      %v555 = vtanh.pop %v521
      %v556 = vtanh.pop %v526
      %v557 = vtanh.pop %v531
      %v558 = vtanh.pop %v536
      %v559 = vtanh.pop %v541
      %v560 = vtanh.pop %v546
      %v561 = vtanh.pop %v551
      %v562 = vld [vmem:[%s5] sm:$0xff]
      %v563 = vld [vmem:[%s5 + $0x8] sm:$0xff]
      %v564 = vld [vmem:[%s5 + $0x10] sm:$0xff]
      %v565 = vld [vmem:[%s5 + $0x18] sm:$0xff]
      %v566 = vld [vmem:[%s5 + $0x20] sm:$0xff]
      %v567 = vld [vmem:[%s5 + $0x28] sm:$0xff]
      %v568 = vld [vmem:[%s5 + $0x30] sm:$0xff]
      %v569 = vld [vmem:[%s5 + $0x38] sm:$0xff]
      %v570 = vld [vmem:[%s5 + $0x40] sm:$0xff]
      %v571 = vld [vmem:[%s5 + $0x48] sm:$0xff]
      %v572 = vld [vmem:[%s5 + $0x50] sm:$0xff]
      %v573 = vld [vmem:[%s5 + $0x58] sm:$0xff]
      %v574 = vld [vmem:[%s5 + $0x60] sm:$0xff]
      %v575 = vld [vmem:[%s5 + $0x68] sm:$0xff]
      %v576 = vld [vmem:[%s5 + $0x70] sm:$0xff]
      %v577 = vld [vmem:[%s5 + $0x78] sm:$0xff]
      %v578 = vld [vmem:[%s6] sm:$0x1]
      %v580 = vlaneseq
      %v581 = vshrl.u32 %v580, 7
      %v582 = vsub.s32 0, %v581
      %v583 = vrot.slane %v578, %v582
      %585 = vmatprep.subr.mxu0 0.0
      %586 = vmatpush1.msra.mxu0 %v562
      %587 = vmatprep.subr.mxu0 0.0
      %588 = vmatpush1.msra.mxu0 %v563
      %589 = vmatprep.subr.mxu0 0.0
      %590 = vmatpush1.msra.mxu0 %v564
      %591 = vmatprep.subr.mxu0 0.0
      %592 = vmatpush1.msra.mxu0 %v565
      %593 = vmatprep.subr.mxu0 0.0
      %594 = vmatpush1.msra.mxu0 %v566
      %595 = vmatprep.subr.mxu0 0.0
      %596 = vmatpush1.msra.mxu0 %v567
      %597 = vmatprep.subr.mxu0 0.0
      %598 = vmatpush1.msra.mxu0 %v568
      %599 = vmatprep.subr.mxu0 0.0
      %600 = vmatpush1.msra.mxu0 %v569
      %601 = vmatprep.subr.mxu0 0.0
      %602 = vmatpush1.msra.mxu0 %v570
      %603 = vmatprep.subr.mxu0 0.0
      %604 = vmatpush1.msra.mxu0 %v571
      %605 = vmatprep.subr.mxu0 0.0
      %606 = vmatpush1.msra.mxu0 %v572
      %607 = vmatprep.subr.mxu0 0.0
      %608 = vmatpush1.msra.mxu0 %v573
      %609 = vmatprep.subr.mxu0 0.0
      %610 = vmatpush1.msra.mxu0 %v574
      %611 = vmatprep.subr.mxu0 0.0
      %612 = vmatpush1.msra.mxu0 %v575
      %613 = vmatprep.subr.mxu0 0.0
      %614 = vmatpush1.msra.mxu0 %v576
      %615 = vmatprep.subr.mxu0 0.0
      %616 = vmatpush1.msra.mxu0 %v577
      %617 = vmatprep.subr.mxu0 0.0
      %618 = vmatpush1.msra.mxu0 0.0
      %619 = vmatprep.subr.mxu0 0.0
      %620 = vmatpush1.msra.mxu0 0.0
      %621 = vmatprep.subr.mxu0 0.0
      %622 = vmatpush1.msra.mxu0 0.0
      %623 = vmatprep.subr.mxu0 0.0
      %624 = vmatpush1.msra.mxu0 0.0
      %625 = vmatprep.subr.mxu0 0.0
      %626 = vmatpush1.msra.mxu0 0.0
      %627 = vmatprep.subr.mxu0 0.0
      %628 = vmatpush1.msra.mxu0 0.0
      %629 = vmatprep.subr.mxu0 0.0
      %630 = vmatpush1.msra.mxu0 0.0
      %631 = vmatprep.subr.mxu0 0.0
      %632 = vmatpush1.msra.mxu0 0.0
      %633 = vmatprep.subr.mxu0 0.0
      %634 = vmatpush1.msra.mxu0 0.0
      %635 = vmatprep.subr.mxu0 0.0
      %636 = vmatpush1.msra.mxu0 0.0
      %637 = vmatprep.subr.mxu0 0.0
      %638 = vmatpush1.msra.mxu0 0.0
      %639 = vmatprep.subr.mxu0 0.0
      %640 = vmatpush1.msra.mxu0 0.0
      %641 = vmatprep.subr.mxu0 0.0
      %642 = vmatpush1.msra.mxu0 0.0
      %643 = vmatprep.subr.mxu0 0.0
      %644 = vmatpush1.msra.mxu0 0.0
      %645 = vmatprep.subr.mxu0 0.0
      %646 = vmatpush1.msra.mxu0 0.0
      %647 = vmatprep.subr.mxu0 0.0
      %648 = vmatpush1.msra.mxu0 0.0
      %649 = vmatprep.mubr.f32.mxu0 0.0
      %650 = vmatmul.mubr.f32.gmra.mrb[0].mxu0 %v554
      %v651 = vpop.f32.mrb[0].mxu0
      %v652 = vadd.f32 %v583, %v651
      %v653 = vpop.f32.mrb[0].mxu0
      %654 = vmatprep.mubr.f32.mxu0 0.0
      %655 = vmatmul.mubr.f32.gmra.mrb[0].mxu0 %v555
      %v656 = vpop.f32.mrb[0].mxu0
      %v657 = vadd.f32 %v583, %v656
      %v658 = vpop.f32.mrb[0].mxu0
      %659 = vmatprep.mubr.f32.mxu0 0.0
      %660 = vmatmul.mubr.f32.gmra.mrb[0].mxu0 %v556
      %v661 = vpop.f32.mrb[0].mxu0
      %v662 = vadd.f32 %v583, %v661
      %v663 = vpop.f32.mrb[0].mxu0
      %664 = vmatprep.mubr.f32.mxu0 0.0
      %665 = vmatmul.mubr.f32.gmra.mrb[0].mxu0 %v557
      %v666 = vpop.f32.mrb[0].mxu0
      %v667 = vadd.f32 %v583, %v666
      %v668 = vpop.f32.mrb[0].mxu0
      %669 = vmatprep.mubr.f32.mxu0 0.0
      %670 = vmatmul.mubr.f32.gmra.mrb[0].mxu0 %v558
      %v671 = vpop.f32.mrb[0].mxu0
      %v672 = vadd.f32 %v583, %v671
      %v673 = vpop.f32.mrb[0].mxu0
      %674 = vmatprep.mubr.f32.mxu0 0.0
      %675 = vmatmul.mubr.f32.gmra.mrb[0].mxu0 %v559
      %v676 = vpop.f32.mrb[0].mxu0
      %v677 = vadd.f32 %v583, %v676
      %v678 = vpop.f32.mrb[0].mxu0
      %679 = vmatprep.mubr.f32.mxu0 0.0
      %680 = vmatmul.mubr.f32.gmra.mrb[0].mxu0 %v560
      %v681 = vpop.f32.mrb[0].mxu0
      %v682 = vadd.f32 %v583, %v681
      %v683 = vpop.f32.mrb[0].mxu0
      %684 = vmatprep.mubr.f32.mxu0 0.0
      %685 = vmatmul.mubr.f32.gmra.mrb[0].mxu0 %v561
      %v686 = vpop.f32.mrb[0].mxu0
      %v687 = vadd.f32 %v583, %v686
      %v688 = vpop.f32.mrb[0].mxu0
      %689 = vdwg.mxu0
      %690 = vst [vmem:[%s280] sm:$0xff] %v652
      %691 = vst [vmem:[%s280 + $0x8] sm:$0xff] %v657
      %692 = vst [vmem:[%s280 + $0x10] sm:$0xff] %v662
      %693 = vst [vmem:[%s280 + $0x18] sm:$0xff] %v667
      %694 = vst [vmem:[%s280 + $0x20] sm:$0xff] %v672
      %695 = vst [vmem:[%s280 + $0x28] sm:$0xff] %v677
      %696 = vst [vmem:[%s280 + $0x30] sm:$0xff] %v682
      %697 = vst [vmem:[%s280 + $0x38] sm:$0xff] %v687
      %s698 = smul.u32 8, %s18
      %p699 = scmp.lt.s32.totalorder %s698, 31
      %s700 = scalar_select %p699, %s698, 31
      %s701 = smul.addr %s700, 8
      %s702 = scalar_lea.vmem %s7, %s701
      // Predicated region
      $region49: #{_lambda_.1} parent=47 // pred_check
        %p703 = pneg %p188
      $region50: #{_lambda_.1} parent=47 // pred_check_branch
        %705 = sbr.rel (%p703) target = $region52
      $region51: #{_lambda_.1} parent=47 // pred_region
        %s706 = smul.u32 8, %s18
      $region52: #{_lambda_.1} parent=47 // pred_fallthru
        _
    $region48: #{_lambda_.1} parent=5 // pred_fallthru
      _
    %p707 = scmp.le.s32.totalorder 2, %s13
    // Predicated region
    $region53: #{_lambda_.1} parent=5 // pred_check
      %p708 = pneg %p707
    $region54: #{_lambda_.1} parent=5 // pred_check_branch
      %710 = sbr.rel (%p708) target = $region56
    $region55: #{_lambda_.1} parent=5 // pred_region
      %s711 = ssub.s32 %s13, 2
      // Predicated region
      $region57: #{_lambda_.1} parent=55 // pred_check
        %p712 = pneg %p194
      $region58: #{_lambda_.1} parent=55 // pred_check_branch
        %714 = sbr.rel (%p712) target = $region60
      $region59: #{_lambda_.1} parent=55 // pred_region
        %s715 = smul.u32 8, %s19
        %p716 = scmp.lt.s32.totalorder %s715, 31
        %s717 = scalar_select %p716, %s715, 31
        %s718 = smul.addr %s717, 8
        %s719 = scalar_lea.vmem %s7, %s718
      $region60: #{_lambda_.1} parent=55 // pred_fallthru
        _
    $region56: #{_lambda_.1} parent=5 // pred_fallthru
      _
  $region6: #{_lambda_.1} parent=0 // loop_footer
    %s17 = sadd.s32 1, %s13
  $region7: #{_lambda_.1} parent=0 // loop_footer_branch
    %12 = sbr.rel target = $region3
  $region8: #{_lambda_.1} parent=0 // loop_exit
    _

</llo_original>
